<compile_context>
chip_gen: v5e
topology: v5e:2x2
jax: 0.10.0
libtpu: 0.0.40
codegen_flags: <defaults>
</compile_context>

<pallas_src>
import functools

import jax
import jax.numpy as jnp
from jax.experimental import pallas as pl
from jax.experimental.pallas import tpu as pltpu


def _pixel_unshuffle_1d_kernel(x_ref, o_ref, *, channels, factor):
    """De-interleave the long (width/lane) axis into `factor` channel groups.

    x_ref block: (C, t_w * r)      o_ref block: (C * r, t_w)
    out[d*C + c, w] = x[c, w*r + d]
    """
    x = x_ref[...]                                   # (C, t_w * r) -- one full load
    if factor == 1:
        o_ref[...] = x                               # identity fast path
        return
    t_w = x.shape[1] // factor
    y = x.reshape(channels, t_w, factor)             # [c, w, d] = x[c, w*r + d]
    y = jnp.transpose(y, (2, 0, 1))                  # (r, C, t_w)  -- VMEM/XLU only
    o_ref[...] = y.reshape(factor * channels, t_w)   # single lane-dense store


def _pick_short_tile(short_width, channels, factor, itemsize):
    """Width tile (in output/"short" columns): full width if it fits, else a
    multiple of 128 sized so double-buffered in+out blocks stay < ~24 MiB."""
    # VMEM per grid step ~= 2 (double buffer) * (input block + output block)
    #                     = 4 * C * r * t_w * itemsize
    budget = 24 * 1024 * 1024
    cap = max(128, budget // (4 * channels * factor * itemsize))
    if short_width <= cap:
        return short_width                 # single width tile (full-dim exemption)
    t_w = min(2048, (cap // 128) * 128)
    return max(t_w, 128)


def pixel_unshuffle_1d(x, downscale_factor):
    """x: [B, C, 1, W]  ->  [B, C*downscale_factor, W//downscale_factor]."""
    r = int(downscale_factor)
    B, C, H, W = x.shape
    if H != 1:
        raise ValueError("PixelUnshuffle1D requires H == 1 (see reference module).")
    if W % r != 0:
        raise ValueError("long_width must be divisible by downscale_factor.")
    Ws = W // r
    itemsize = jnp.dtype(x.dtype).itemsize

    t_w = _pick_short_tile(Ws, C, r, itemsize)
    n_wt = pl.cdiv(Ws, t_w)

    kernel = functools.partial(_pixel_unshuffle_1d_kernel, channels=C, factor=r)

    # Double-buffered input + output blocks, plus slack (safe on v5e/v6e/v7x).
    block_pair_bytes = 2 * C * r * t_w * itemsize
    vmem_limit = int(min(100 * 1024 * 1024,
                         max(32 * 1024 * 1024, 4 * block_pair_bytes)))

    return pl.pallas_call(
        kernel,
        out_shape=jax.ShapeDtypeStruct((B, C * r, Ws), x.dtype),
        grid=(B, n_wt),
        in_specs=[
            # Native NCHW read; batch and the singleton H axis are squeezed so
            # the kernel sees a (C, t_w * r) tile.
            pl.BlockSpec((None, C, None, t_w * r), lambda b, wi: (b, 0, 0, wi)),
        ],
        out_specs=pl.BlockSpec((None, C * r, t_w), lambda b, wi: (b, 0, wi)),
        compiler_params=pltpu.CompilerParams(
            dimension_semantics=("parallel", "parallel"),
            vmem_limit_bytes=vmem_limit,
        ),
        # Pure data movement: flops = 0, bytes = read x once + write out once.
        cost_estimate=pl.CostEstimate(
            flops=0,
            transcendentals=0,
            bytes_accessed=2 * B * C * W * itemsize,
        ),
    )(x)


def _reference(x, r):
    """Pure-JAX re-statement of the PyTorch forward (H == 1)."""
    B, C, H, W = x.shape
    Ws = W // r
    y = x.reshape(B, C, H * Ws, r)       # == view([B, C, H, Ws, r]) with H == 1
    y = jnp.transpose(y, (0, 3, 1, 2))   # permute(0, 3, 1, 2)
    return y.reshape(B, C * r, Ws)       # view([B, C*r, Ws])


if __name__ == "__main__":
    key = jax.random.PRNGKey(0)
    B, C, H, W = 2, 4, 1, 16
    r = 2
    x = jax.random.normal(key, (B, C, H, W), dtype=jnp.float32)

    out = pixel_unshuffle_1d(x, r)
    out = jax.block_until_ready(out)

    ref = _reference(x, r)
    assert out.shape == (B, C * r, W // r), out.shape
    assert out.dtype == x.dtype
    assert jnp.array_equal(out, ref), "kernel output mismatch vs reference"
    print("KERNEL_OK")
</pallas_src>

<mosaic_0001>
module attributes {stable_mosaic.version = 11 : i64} {
  func.func @_pixel_unshuffle_1d_kernel(%arg0: i32, %arg1: i32, %arg2: memref<1x4x1x16xf32, #tpu.memory_space<vmem>>, %arg3: memref<1x8x8xf32, #tpu.memory_space<vmem>>) attributes {dimension_semantics = [#tpu.dimension_semantics<parallel>, #tpu.dimension_semantics<parallel>], iteration_bounds = array<i64: 2, 1>, scalar_prefetch = 0 : i64, scratch_operands = 0 : i64, tpu.core_type = #tpu.core_type<tc>, window_params = [{transform_indices = @transform_0, window_bounds = array<i64: 1, 4, 1, 16>}, {transform_indices = @transform_1, window_bounds = array<i64: 1, 8, 8>}]} {
    %c0 = arith.constant 0 : index
    %c0_0 = arith.constant 0 : index
    %c0_1 = arith.constant 0 : index
    %c0_2 = arith.constant 0 : index
    %0 = vector.load %arg2[%c0, %c0_0, %c0_1, %c0_2] : memref<1x4x1x16xf32, #tpu.memory_space<vmem>>, vector<1x4x1x16xf32>
    %1 = vector.shape_cast %0 : vector<1x4x1x16xf32> to vector<4x16xf32>
    %2 = vector.shape_cast %1 : vector<4x16xf32> to vector<4x8x2xf32>
    %3 = tpu.transpose %2, [2, 0, 1] : vector<4x8x2xf32> -> vector<2x4x8xf32>
    %4 = vector.shape_cast %3 : vector<2x4x8xf32> to vector<8x8xf32>
    %c0_3 = arith.constant 0 : index
    %c0_4 = arith.constant 0 : index
    %c0_5 = arith.constant 0 : index
    %5 = vector.load %arg3[%c0_3, %c0_4, %c0_5] : memref<1x8x8xf32, #tpu.memory_space<vmem>>, vector<1x8x8xf32>
    %6 = vector.shape_cast %5 : vector<1x8x8xf32> to vector<8x8xf32>
    %7 = vector.shape_cast %4 : vector<8x8xf32> to vector<1x8x8xf32>
    tpu.vector_store %arg3[%c0_3, %c0_4, %c0_5], %7 {strides = array<i32>} : memref<1x8x8xf32, #tpu.memory_space<vmem>>, vector<1x8x8xf32>,
    return
  }
  func.func @transform_0(%arg0: i32, %arg1: i32) -> (i32, i32, i32, i32) {
    %c0_i32 = arith.constant 0 : i32
    %c0_i32_0 = arith.constant 0 : i32
    %c0_i32_1 = arith.constant 0 : i32
    return %arg0, %c0_i32, %c0_i32_0, %arg1 : i32, i32, i32, i32
  }
  func.func @transform_1(%arg0: i32, %arg1: i32) -> (i32, i32, i32) {
    %c0_i32 = arith.constant 0 : i32
    %c0_i32_0 = arith.constant 0 : i32
    return %arg0, %c0_i32, %arg1 : i32, i32, i32
  }
}

</mosaic_0001>

<llo_original>
// kernel: tpu_custom_call.1
$region0: #{tpu_custom_call.1}
  #allocation0 [shape = 'u32[]', space=smem, size = 0x4, offset = 0x4, fixed_abs, tag = 'smem constant byte address 0x4 - core index']
  #allocation1 [shape = 'u32[72,128]{1,0:T(1,128)}', space=vmem, size = 0x9000, scoped, tag = 'internal scratch']
  %s0 = inlined_call_operand.hbm [shape: f32[2,4,1,16], index: 0, kind: input, shape index: {}]
  %s1 = inlined_call_operand.hbm [shape: f32[2,8,8], index: 1, kind: output, shape index: {}]
  %s2 = sld [smem:[#allocation0]]
  $region41: #{tpu_custom_call.1} parent=0
    _
  %s4 = ssub.s32 1, %s2
  %s5 = scalar_select 0, %s4, %s2
  $region1: #{tpu_custom_call.1} parent=0
    #allocation2 [shape = 'u8[4096]{0}', space=vmem, size = 0x1000, scoped, tag = 'input window, operand 0']
    #allocation3 [shape = 's32[2]{0}', space=sflag, size = 0x8, scoped, tag = 'scoped memory for tpu_custom_call.1']
    #allocation4 [shape = 's32[2]{0}', space=sflag, size = 0x8, scoped, tag = 'scoped memory for tpu_custom_call.1']
    #allocation5 [shape = 'u8[8192]{0}', space=vmem, size = 0x2000, scoped, tag = 'output window, operand 0']
    %6 = vsyncpa [#allocation3], 0
    %s7 = scalar_lea.sflag [#allocation3], 1
    %8 = vsyncpa %s7, 0
    %9 = vsyncpa [#allocation4], 0
    %s10 = scalar_lea.sflag [#allocation4], 1
    %11 = vsyncpa %s10, 0
    loop: start=0, step=1, limit=4
    $region2: #{tpu_custom_call.1} parent=1 // loop_pre_header
      _
    $region3: #{tpu_custom_call.1} parent=1 // loop_header
      %s13 = sphi 0, %s17
      %p14 = scmp.ge.s32.totalorder %s13, 4
      %s20 = sphi 0, %s32
      %s21 = sphi 0, %s28
      %s22 = sphi 0, %s20
      %s23 = sphi 0, %s21
      %s24 = sphi 0, %s22
      %s25 = sphi 0, %s23
      %s37 = sphi 0, %s39
      %s40 = sphi 0, %s37
      %s41 = sphi 0, %s40
      %s57 = sphi 0, %s41
      %s65 = sphi 0, %s67
      %s68 = sphi 0, %s65
      %s69 = sphi 0, %s68
      %s85 = sphi 0, %s69
    $region4: #{tpu_custom_call.1} parent=1 // loop_header_branch
      %16 = sbr.rel (%p14) target = $region8
    $region5: #{tpu_custom_call.1} parent=1 // loop_body
      %s18 = ssub.s32 %s13, 1
      %s19 = ssub.s32 %s13, 2
      %s26 = sadd.s32 1, %s21
      %p27 = scmp.ge.s32.totalorder %s26, 1
      %s28 = scalar_select %p27, 0, %s26
      %s29 = sadd.s32 1, %s20
      %s30 = scalar_select %p27, %s29, %s20
      %p31 = scmp.ge.s32.totalorder %s30, 2
      %s32 = scalar_select %p31, 0, %s30
      %s33 = ssub.s32 %s20, %s32
      %s34 = ssub.s32 %s21, %s28
      %s35 = sor.u32 %s33, %s34
      %p36 = scmp.eq.s32.totalorder %s35, 0
      %s38 = sadd.s32 %s37, 1
      %s39 = scalar_select %p36, %s37, %s38
      %p42 = pneg %p36
      %p43 = scmp.eq.s32.totalorder %s13, 1
      %p44 = por %p42, %p43
      %p45 = scmp.ne.s32.totalorder %s37, %s40
      %p46 = scmp.eq.s32.totalorder %s13, 0
      %p47 = por %p45, %p46
      %p48 = scmp.ne.s32.totalorder %s37, %s40
      %p49 = scmp.eq.s32.totalorder %s18, 1
      %p50 = por %p48, %p49
      %p51 = scmp.ne.s32.totalorder %s40, %s41
      %p52 = scmp.eq.s32.totalorder %s18, 0
      %p53 = por %p51, %p52
      %p54 = scmp.ne.s32.totalorder %s40, %s41
      %p55 = scmp.eq.s32.totalorder %s19, 1
      %p56 = por %p54, %p55
      %p58 = scmp.ne.s32.totalorder %s41, %s57
      %p59 = scmp.eq.s32.totalorder %s19, 0
      %p60 = por %p58, %p59
      %s61 = ssub.s32 %s20, %s32
      %s62 = ssub.s32 %s21, %s28
      %s63 = sor.u32 %s61, %s62
      %p64 = scmp.eq.s32.totalorder %s63, 0
      %s66 = sadd.s32 %s65, 1
      %s67 = scalar_select %p64, %s65, %s66
      %p70 = pneg %p64
      %p71 = scmp.eq.s32.totalorder %s13, 1
      %p72 = por %p70, %p71
      %p73 = scmp.ne.s32.totalorder %s65, %s68
      %p74 = scmp.eq.s32.totalorder %s13, 0
      %p75 = por %p73, %p74
      %p76 = scmp.ne.s32.totalorder %s65, %s68
      %p77 = scmp.eq.s32.totalorder %s18, 1
      %p78 = por %p76, %p77
      %p79 = scmp.ne.s32.totalorder %s68, %s69
      %p80 = scmp.eq.s32.totalorder %s18, 0
      %p81 = por %p79, %p80
      %p82 = scmp.ne.s32.totalorder %s68, %s69
      %p83 = scmp.eq.s32.totalorder %s19, 1
      %p84 = por %p82, %p83
      %p86 = scmp.ne.s32.totalorder %s69, %s85
      %p87 = scmp.eq.s32.totalorder %s19, 0
      %p88 = por %p86, %p87
      %p89 = scmp.le.s32.totalorder 1, %s13
      %p90 = scmp.lt.s32.totalorder %s13, 3
      %p91 = pnand %p89, %p90
      %p92 = pneg %p91
      // Predicated region
      $region9: #{tpu_custom_call.1} parent=5 // pred_check
        _
      $region10: #{tpu_custom_call.1} parent=5 // pred_check_branch
        %94 = sbr.rel (%p91) target = $region12
      $region11: #{tpu_custom_call.1} parent=5 // pred_region
        %s95 = ssub.s32 %s13, 1
      $region12: #{tpu_custom_call.1} parent=5 // pred_fallthru
        _
      %p96 = scmp.lt.s32.totalorder %s13, 2
      // Predicated region
      $region13: #{tpu_custom_call.1} parent=5 // pred_check
        %p97 = pneg %p96
      $region14: #{tpu_custom_call.1} parent=5 // pred_check_branch
        %99 = sbr.rel (%p97) target = $region16
      $region15: #{tpu_custom_call.1} parent=5 // pred_region
        // Predicated region
        $region17: #{tpu_custom_call.1} parent=15 // pred_check
          %p100 = pneg %p47
        $region18: #{tpu_custom_call.1} parent=15 // pred_check_branch
          %102 = sbr.rel (%p100) target = $region20
        $region19: #{tpu_custom_call.1} parent=15 // pred_region
          %s103 = sand.u32 %s37, 1
          %s104 = scalar_lea.sflag [#allocation3], %s103
          %s105 = sand.u32 %s37, 1
          %s106 = smul.addr %s105, 4
          %s107 = scalar_lea.vmem [#allocation2], %s106
          %109 = vsyncadd %s104, 0
          %s110 = smul.addr %s20, 4
          %s111 = sadd.s32 %s21, %s110
          %s112 = scalar_lea.hbm %s0, %s111
          %s113 = sshll.u32 %s112, 4
          %s114 = int_to_ptr.hbm [resolvable:$true] %s113
          %s115 = sshll.u32 %s107, 4
          %s116 = int_to_ptr.vmem [resolvable:$true] %s115
          %121 = dma.hbm_to_vmem [thread:$0]  %s114, 64, %s116, %s104, 16, 16, 1
        $region20: #{tpu_custom_call.1} parent=15 // pred_fallthru
          _
      $region16: #{tpu_custom_call.1} parent=5 // pred_fallthru
        _
      %p122 = scmp.le.s32.totalorder 1, %s13
      %p123 = scmp.lt.s32.totalorder %s13, 3
      %p124 = pnand %p122, %p123
      %p125 = pneg %p124
      // Predicated region
      $region21: #{tpu_custom_call.1} parent=5 // pred_check
        _
      $region22: #{tpu_custom_call.1} parent=5 // pred_check_branch
        %127 = sbr.rel (%p124) target = $region24
      $region23: #{tpu_custom_call.1} parent=5 // pred_region
        %s128 = ssub.s32 %s13, 1
        %s129 = sand.u32 %s40, 1
        %s130 = scalar_lea.sflag [#allocation3], %s129
        %s131 = sand.u32 %s40, 1
        %s132 = smul.addr %s131, 4
        %s133 = scalar_lea.vmem [#allocation2], %s132
        // Predicated region
        $region25: #{tpu_custom_call.1} parent=23 // pred_check
          %p134 = pneg %p53
        $region26: #{tpu_custom_call.1} parent=23 // pred_check_branch
          %136 = sbr.rel (%p134) target = $region28
        $region27: #{tpu_custom_call.1} parent=23 // pred_region
          %138 = dma.done %s130, 64
        $region28: #{tpu_custom_call.1} parent=23 // pred_fallthru
          _
        %s139 = sand.u32 %s40, 1
        %s140 = scalar_lea.sflag [#allocation3], %s139
        %s141 = sand.u32 %s40, 1
        %s142 = smul.addr %s141, 4
        %s143 = scalar_lea.vmem [#allocation2], %s142
        %p144 = pneg %p53
        %p145 = pneg %p50
        %p146 = pneg %p81
        %p147 = pneg %p78
        %s148 = sand.u32 %s68, 1
        %s149 = scalar_lea.sflag [#allocation4], %s148
        %s150 = sand.u32 %s68, 1
        %s151 = smul.addr %s150, 8
        %s152 = scalar_lea.vmem [#allocation5], %s151
        %v153 = vld [vmem:[%s133] sm:$0x1]
        %v154 = vld [vmem:[%s133 + $0x1] sm:$0x1]
        %v155 = vld [vmem:[%s133 + $0x2] sm:$0x1]
        %v156 = vld [vmem:[%s133 + $0x3] sm:$0x1]
        %161 = vrot.lane.b32.xlu0 %v153, 126
        %v162 = vpop.permute.xlu0 %161
        %163 = vrot.lane.b32.xlu0 %v154, 126
        %v164 = vpop.permute.xlu0 %163
        %165 = vrot.lane.b32.xlu0 %v155, 126
        %v166 = vpop.permute.xlu0 %165
        %167 = vrot.lane.b32.xlu0 %v156, 126
        %v168 = vpop.permute.xlu0 %167
        %169 = vrot.lane.b32.xlu0 %v153, 124
        %v170 = vpop.permute.xlu0 %169
        %171 = vrot.lane.b32.xlu0 %v154, 124
        %v172 = vpop.permute.xlu0 %171
        %173 = vrot.lane.b32.xlu0 %v155, 124
        %v174 = vpop.permute.xlu0 %173
        %175 = vrot.lane.b32.xlu0 %v156, 124
        %v176 = vpop.permute.xlu0 %175
        %177 = vrot.lane.b32.xlu0 %v153, 122
        %v178 = vpop.permute.xlu0 %177
        %179 = vrot.lane.b32.xlu0 %v154, 122
        %v180 = vpop.permute.xlu0 %179
        %181 = vrot.lane.b32.xlu0 %v155, 122
        %v182 = vpop.permute.xlu0 %181
        %183 = vrot.lane.b32.xlu0 %v156, 122
        %v184 = vpop.permute.xlu0 %183
        %185 = vrot.lane.b32.xlu0 %v153, 120
        %v186 = vpop.permute.xlu0 %185
        %187 = vrot.lane.b32.xlu0 %v154, 120
        %v188 = vpop.permute.xlu0 %187
        %189 = vrot.lane.b32.xlu0 %v155, 120
        %v190 = vpop.permute.xlu0 %189
        %191 = vrot.lane.b32.xlu0 %v156, 120
        %v192 = vpop.permute.xlu0 %191
        %193 = vrot.lane.b32.xlu0 %v153, 118
        %v194 = vpop.permute.xlu0 %193
        %195 = vrot.lane.b32.xlu0 %v154, 118
        %v196 = vpop.permute.xlu0 %195
        %197 = vrot.lane.b32.xlu0 %v155, 118
        %v198 = vpop.permute.xlu0 %197
        %199 = vrot.lane.b32.xlu0 %v156, 118
        %v200 = vpop.permute.xlu0 %199
        %201 = vrot.lane.b32.xlu0 %v153, 116
        %v202 = vpop.permute.xlu0 %201
        %203 = vrot.lane.b32.xlu0 %v154, 116
        %v204 = vpop.permute.xlu0 %203
        %205 = vrot.lane.b32.xlu0 %v155, 116
        %v206 = vpop.permute.xlu0 %205
        %207 = vrot.lane.b32.xlu0 %v156, 116
        %v208 = vpop.permute.xlu0 %207
        %209 = vrot.lane.b32.xlu0 %v153, 114
        %v210 = vpop.permute.xlu0 %209
        %211 = vrot.lane.b32.xlu0 %v154, 114
        %v212 = vpop.permute.xlu0 %211
        %213 = vrot.lane.b32.xlu0 %v155, 114
        %v214 = vpop.permute.xlu0 %213
        %215 = vrot.lane.b32.xlu0 %v156, 114
        %v216 = vpop.permute.xlu0 %215
        %217 = vst [vmem:[#allocation1] ss:$9 sm:$0xff] %v153
        %s218 = scalar_lea.vmem [#allocation1], 1
        %219 = vst [vmem:[%s218] ss:$9 sm:$0xff] %v162
        %s220 = scalar_lea.vmem [#allocation1], 2
        %221 = vst [vmem:[%s220] ss:$9 sm:$0xff] %v170
        %s222 = scalar_lea.vmem [#allocation1], 3
        %223 = vst [vmem:[%s222] ss:$9 sm:$0xff] %v178
        %s224 = scalar_lea.vmem [#allocation1], 4
        %225 = vst [vmem:[%s224] ss:$9 sm:$0xff] %v186
        %s226 = scalar_lea.vmem [#allocation1], 5
        %227 = vst [vmem:[%s226] ss:$9 sm:$0xff] %v194
        %s228 = scalar_lea.vmem [#allocation1], 6
        %229 = vst [vmem:[%s228] ss:$9 sm:$0xff] %v202
        %s230 = scalar_lea.vmem [#allocation1], 7
        %231 = vst [vmem:[%s230] ss:$9 sm:$0xff] %v210
        %v232 = vld [vmem:[#allocation1] sm:$0xff]
        %233 = vst [vmem:[#allocation1] ss:$9 sm:$0xff] %v154
        %234 = vst [vmem:[%s218] ss:$9 sm:$0xff] %v164
        %235 = vst [vmem:[%s220] ss:$9 sm:$0xff] %v172
        %236 = vst [vmem:[%s222] ss:$9 sm:$0xff] %v180
        %237 = vst [vmem:[%s224] ss:$9 sm:$0xff] %v188
        %238 = vst [vmem:[%s226] ss:$9 sm:$0xff] %v196
        %239 = vst [vmem:[%s228] ss:$9 sm:$0xff] %v204
        %240 = vst [vmem:[%s230] ss:$9 sm:$0xff] %v212
        %v241 = vld [vmem:[#allocation1] sm:$0xff]
        %242 = vst [vmem:[#allocation1] ss:$9 sm:$0xff] %v155
        %243 = vst [vmem:[%s218] ss:$9 sm:$0xff] %v166
        %244 = vst [vmem:[%s220] ss:$9 sm:$0xff] %v174
        %245 = vst [vmem:[%s222] ss:$9 sm:$0xff] %v182
        %246 = vst [vmem:[%s224] ss:$9 sm:$0xff] %v190
        %247 = vst [vmem:[%s226] ss:$9 sm:$0xff] %v198
        %248 = vst [vmem:[%s228] ss:$9 sm:$0xff] %v206
        %249 = vst [vmem:[%s230] ss:$9 sm:$0xff] %v214
        %v250 = vld [vmem:[#allocation1] sm:$0xff]
        %251 = vst [vmem:[#allocation1] ss:$9 sm:$0xff] %v156
        %252 = vst [vmem:[%s218] ss:$9 sm:$0xff] %v168
        %253 = vst [vmem:[%s220] ss:$9 sm:$0xff] %v176
        %254 = vst [vmem:[%s222] ss:$9 sm:$0xff] %v184
        %255 = vst [vmem:[%s224] ss:$9 sm:$0xff] %v192
        %256 = vst [vmem:[%s226] ss:$9 sm:$0xff] %v200
        %257 = vst [vmem:[%s228] ss:$9 sm:$0xff] %v208
        %258 = vst [vmem:[%s230] ss:$9 sm:$0xff] %v216
        %v259 = vld [vmem:[#allocation1] sm:$0xff]
        %264 = vxpose.xlu0.b32.start [1/16] %v232, 128
        %265 = vxpose.xlu0.b32.cont [2/16] 0.0, 128
        %266 = vxpose.xlu0.b32.cont [3/16] 0.0, 128
        %267 = vxpose.xlu0.b32.cont [4/16] 0.0, 128
        %268 = vxpose.xlu0.b32.cont [5/16] 0.0, 128
        %269 = vxpose.xlu0.b32.cont [6/16] 0.0, 128
        %270 = vxpose.xlu0.b32.cont [7/16] 0.0, 128
        %271 = vxpose.xlu0.b32.cont [8/16] 0.0, 128
        %272 = vxpose.xlu0.b32.cont [9/16] 0.0, 128
        %273 = vxpose.xlu0.b32.cont [10/16] 0.0, 128
        %274 = vxpose.xlu0.b32.cont [11/16] 0.0, 128
        %275 = vxpose.xlu0.b32.cont [12/16] 0.0, 128
        %276 = vxpose.xlu0.b32.cont [13/16] 0.0, 128
        %277 = vxpose.xlu0.b32.cont [14/16] 0.0, 128
        %278 = vxpose.xlu0.b32.cont [15/16] 0.0, 128
        %279 = vxpose.xlu0.b32.end [16/16] 0.0, 128
        %v280 = vpop.trf.xlu0
        %v281 = vpop.trf.xlu0
        %v282 = vpop.trf.xlu0
        %v283 = vpop.trf.xlu0
        %v284 = vpop.trf.xlu0
        %v285 = vpop.trf.xlu0
        %v286 = vpop.trf.xlu0
        %v287 = vpop.trf.xlu0
        %v288 = vpop.trf.xlu0
        %v289 = vpop.trf.xlu0
        %v290 = vpop.trf.xlu0
        %v291 = vpop.trf.xlu0
        %v292 = vpop.trf.xlu0
        %v293 = vpop.trf.xlu0
        %v294 = vpop.trf.xlu0
        %v295 = vpop.trf.xlu0
        %296 = vxpose.xlu0.b32.start [1/16] %v241, 128
        %297 = vxpose.xlu0.b32.cont [2/16] 0.0, 128
        %298 = vxpose.xlu0.b32.cont [3/16] 0.0, 128
        %299 = vxpose.xlu0.b32.cont [4/16] 0.0, 128
        %300 = vxpose.xlu0.b32.cont [5/16] 0.0, 128
        %301 = vxpose.xlu0.b32.cont [6/16] 0.0, 128
        %302 = vxpose.xlu0.b32.cont [7/16] 0.0, 128
        %303 = vxpose.xlu0.b32.cont [8/16] 0.0, 128
        %304 = vxpose.xlu0.b32.cont [9/16] 0.0, 128
        %305 = vxpose.xlu0.b32.cont [10/16] 0.0, 128
        %306 = vxpose.xlu0.b32.cont [11/16] 0.0, 128
        %307 = vxpose.xlu0.b32.cont [12/16] 0.0, 128
        %308 = vxpose.xlu0.b32.cont [13/16] 0.0, 128
        %309 = vxpose.xlu0.b32.cont [14/16] 0.0, 128
        %310 = vxpose.xlu0.b32.cont [15/16] 0.0, 128
        %311 = vxpose.xlu0.b32.end [16/16] 0.0, 128
        %v312 = vpop.trf.xlu0
        %v313 = vpop.trf.xlu0
        %v314 = vpop.trf.xlu0
        %v315 = vpop.trf.xlu0
        %v316 = vpop.trf.xlu0
        %v317 = vpop.trf.xlu0
        %v318 = vpop.trf.xlu0
        %v319 = vpop.trf.xlu0
        %v320 = vpop.trf.xlu0
        %v321 = vpop.trf.xlu0
        %v322 = vpop.trf.xlu0
        %v323 = vpop.trf.xlu0
        %v324 = vpop.trf.xlu0
        %v325 = vpop.trf.xlu0
        %v326 = vpop.trf.xlu0
        %v327 = vpop.trf.xlu0
        %328 = vxpose.xlu0.b32.start [1/16] %v250, 128
        %329 = vxpose.xlu0.b32.cont [2/16] 0.0, 128
        %330 = vxpose.xlu0.b32.cont [3/16] 0.0, 128
        %331 = vxpose.xlu0.b32.cont [4/16] 0.0, 128
        %332 = vxpose.xlu0.b32.cont [5/16] 0.0, 128
        %333 = vxpose.xlu0.b32.cont [6/16] 0.0, 128
        %334 = vxpose.xlu0.b32.cont [7/16] 0.0, 128
        %335 = vxpose.xlu0.b32.cont [8/16] 0.0, 128
        %336 = vxpose.xlu0.b32.cont [9/16] 0.0, 128
        %337 = vxpose.xlu0.b32.cont [10/16] 0.0, 128
        %338 = vxpose.xlu0.b32.cont [11/16] 0.0, 128
        %339 = vxpose.xlu0.b32.cont [12/16] 0.0, 128
        %340 = vxpose.xlu0.b32.cont [13/16] 0.0, 128
        %341 = vxpose.xlu0.b32.cont [14/16] 0.0, 128
        %342 = vxpose.xlu0.b32.cont [15/16] 0.0, 128
        %343 = vxpose.xlu0.b32.end [16/16] 0.0, 128
        %v344 = vpop.trf.xlu0
        %v345 = vpop.trf.xlu0
        %v346 = vpop.trf.xlu0
        %v347 = vpop.trf.xlu0
        %v348 = vpop.trf.xlu0
        %v349 = vpop.trf.xlu0
        %v350 = vpop.trf.xlu0
        %v351 = vpop.trf.xlu0
        %v352 = vpop.trf.xlu0
        %v353 = vpop.trf.xlu0
        %v354 = vpop.trf.xlu0
        %v355 = vpop.trf.xlu0
        %v356 = vpop.trf.xlu0
        %v357 = vpop.trf.xlu0
        %v358 = vpop.trf.xlu0
        %v359 = vpop.trf.xlu0
        %360 = vxpose.xlu0.b32.start [1/16] %v259, 128
        %361 = vxpose.xlu0.b32.cont [2/16] 0.0, 128
        %362 = vxpose.xlu0.b32.cont [3/16] 0.0, 128
        %363 = vxpose.xlu0.b32.cont [4/16] 0.0, 128
        %364 = vxpose.xlu0.b32.cont [5/16] 0.0, 128
        %365 = vxpose.xlu0.b32.cont [6/16] 0.0, 128
        %366 = vxpose.xlu0.b32.cont [7/16] 0.0, 128
        %367 = vxpose.xlu0.b32.cont [8/16] 0.0, 128
        %368 = vxpose.xlu0.b32.cont [9/16] 0.0, 128
        %369 = vxpose.xlu0.b32.cont [10/16] 0.0, 128
        %370 = vxpose.xlu0.b32.cont [11/16] 0.0, 128
        %371 = vxpose.xlu0.b32.cont [12/16] 0.0, 128
        %372 = vxpose.xlu0.b32.cont [13/16] 0.0, 128
        %373 = vxpose.xlu0.b32.cont [14/16] 0.0, 128
        %374 = vxpose.xlu0.b32.cont [15/16] 0.0, 128
        %375 = vxpose.xlu0.b32.end [16/16] 0.0, 128
        %v376 = vpop.trf.xlu0
        %v377 = vpop.trf.xlu0
        %v378 = vpop.trf.xlu0
        %v379 = vpop.trf.xlu0
        %v380 = vpop.trf.xlu0
        %v381 = vpop.trf.xlu0
        %v382 = vpop.trf.xlu0
        %v383 = vpop.trf.xlu0
        %v384 = vpop.trf.xlu0
        %v385 = vpop.trf.xlu0
        %v386 = vpop.trf.xlu0
        %v387 = vpop.trf.xlu0
        %v388 = vpop.trf.xlu0
        %v389 = vpop.trf.xlu0
        %v390 = vpop.trf.xlu0
        %v391 = vpop.trf.xlu0
        %v392 = vrot.slane %v344, 4
        %vm393 = vcmask 1047556
        %v394 = vsel %vm393, %v392, %v280
        %v396 = vunpack.c.l.s4 1983009808
        %v397 = vunpack.c.0.s8 %v396
        %v398 = vperm.slane %v394, %v397
        %v399 = vrot.slane %v376, 4
        %v400 = vsel %vm393, %v399, %v312
        %v402 = vunpack.c.l.s4 1983009808
        %v403 = vunpack.c.0.s8 %v402
        %v404 = vperm.slane %v400, %v403
        %v405 = vrot.slane %v404, 4
        %v406 = vsel %vm393, %v405, %v398
        %v408 = vunpack.c.l.s4 1934713408
        %v409 = vunpack.c.0.s8 %v408
        %v410 = vperm.slane %v406, %v409
        %v411 = vrot.slane %v410, 4
        %v412 = vsel %vm393, 0.0, %v411
        %415 = vst [vmem:[#allocation1] ss:$2 sm:$0xff] %v410
        %s416 = scalar_lea.vmem [#allocation1], 1
        %417 = vst [vmem:[%s416] ss:$2 sm:$0xff] %v412
        %v418 = vld.sshfl [vmem:[#allocation1] sm:$0xff pattern:$0x75316420]
        %vm420 = vcmask 64512
        %421 = vst.msk [vmem:[%s152] sm:$0xff] %vm420, %v418
        %s422 = sand.u32 %s68, 1
        %s423 = scalar_lea.sflag [#allocation4], %s422
        %s424 = sand.u32 %s68, 1
        %s425 = smul.addr %s424, 8
        %s426 = scalar_lea.vmem [#allocation5], %s425
        // Predicated region
        $region29: #{tpu_custom_call.1} parent=23 // pred_check
          %p427 = pneg %p78
        $region30: #{tpu_custom_call.1} parent=23 // pred_check_branch
          %429 = sbr.rel (%p427) target = $region32
        $region31: #{tpu_custom_call.1} parent=23 // pred_region
          %431 = vsyncadd %s423, 0
          %s432 = sadd.s32 %s23, %s22
          %s433 = smul.addr %s432, 8
          %s434 = scalar_lea.hbm %s1, %s433
          %s436 = sshll.u32 %s426, 4
          %s437 = int_to_ptr.vmem [resolvable:$true] %s436
          %s438 = sshll.u32 %s434, 4
          %s439 = int_to_ptr.hbm [resolvable:$true] %s438
          %441 = dma.vmem_to_hbm [thread:$0]  %s437, 128, %s439, %s423
        $region32: #{tpu_custom_call.1} parent=23 // pred_fallthru
          _
      $region24: #{tpu_custom_call.1} parent=5 // pred_fallthru
        _
      %p442 = scmp.le.s32.totalorder 2, %s13
      // Predicated region
      $region33: #{tpu_custom_call.1} parent=5 // pred_check
        %p443 = pneg %p442
      $region34: #{tpu_custom_call.1} parent=5 // pred_check_branch
        %445 = sbr.rel (%p443) target = $region36
      $region35: #{tpu_custom_call.1} parent=5 // pred_region
        %s446 = ssub.s32 %s13, 2
        // Predicated region
        $region37: #{tpu_custom_call.1} parent=35 // pred_check
          %p447 = pneg %p84
        $region38: #{tpu_custom_call.1} parent=35 // pred_check_branch
          %449 = sbr.rel (%p447) target = $region40
        $region39: #{tpu_custom_call.1} parent=35 // pred_region
          %s450 = sand.u32 %s69, 1
          %s451 = scalar_lea.sflag [#allocation4], %s450
          %s452 = sand.u32 %s69, 1
          %s453 = smul.addr %s452, 8
          %s454 = scalar_lea.vmem [#allocation5], %s453
          %456 = dma.done %s451, 128
        $region40: #{tpu_custom_call.1} parent=35 // pred_fallthru
          _
      $region36: #{tpu_custom_call.1} parent=5 // pred_fallthru
        _
    $region6: #{tpu_custom_call.1} parent=1 // loop_footer
      %s17 = sadd.s32 1, %s13
    $region7: #{tpu_custom_call.1} parent=1 // loop_footer_branch
      %12 = sbr.rel target = $region3
    $region8: #{tpu_custom_call.1} parent=1 // loop_exit
      _
    %457 = vsyncpa [#allocation3], 1
    %s458 = scalar_lea.sflag [#allocation3], 1
    %459 = vsyncpa %s458, 1
    %460 = vsyncpa [#allocation4], 1
    %s461 = scalar_lea.sflag [#allocation4], 1
    %462 = vsyncpa %s461, 1

</llo_original>
